<compile_context>
chip_gen: v6e
topology: v6e:2x2x1
jax: 0.10.0
libtpu: 0.0.40
codegen_flags: <defaults>
</compile_context>

<pallas_src>
import functools

import jax
import jax.numpy as jnp
from jax.experimental import pallas as pl
from jax.experimental.pallas import tpu as pltpu


_LANE = 128
_MAX_TILE_M = 2048
_XW_RESIDENT_BYTES = 8 * 1024 * 1024


def _round_up(x, m):
    return (x + m - 1) // m * m


def _vmem_limit_bytes():
    cap = None
    try:
        cap = getattr(pltpu.get_tpu_info(), "vmem_capacity_bytes", None)
    except Exception:
        cap = None
    if not cap:
        cap = 64 * 1024 * 1024  # conservative default (v7x physical VMEM)
    # ~75% of physical, capped at 100 MiB (v5e/v6e have 128 MiB physical).
    return int(min(cap * 3 // 4, 100 * 1024 * 1024))


def _choose_tiles(num_nodes):
    """Pick (n_pad, tile_m, tile_k) minimizing quadratic padding waste."""
    n_al = _round_up(max(num_nodes, 8), _LANE)
    # Contraction tile: minimize n_pad first, then prefer the largest tile.
    tile_k, n_pad = min(
        ((tk, _round_up(n_al, tk)) for tk in (512, 256, 128)),
        key=lambda t: (t[1], -t[0]),
    )
    # Row tile: largest candidate dividing n_pad.
    tile_m = 128
    for tm in (_MAX_TILE_M, 1024, 512, 256, 128):
        if tm <= n_pad and n_pad % tm == 0:
            tile_m = tm
            break
    # v7x megacore: make sure the "parallel" row axis has >= 2 tiles.
    if n_pad // tile_m < 2 and (n_pad // 2) >= 8 and (n_pad // 2) % 8 == 0:
        tile_m = n_pad // 2
    return n_pad, tile_m, tile_k


def _pad2(x, rows, cols, dtype):
    r, c = x.shape
    return jnp.pad(x, ((0, rows - r), (0, cols - c))).astype(dtype)


# ----------------------------------------------------------------------------
# Plain-JAX glue: raw (A + I) adjacency (bf16) + D^{-1/2} from edge_index.
# ----------------------------------------------------------------------------
def build_graph(edge_index, num_nodes, padded_nodes):
    src = edge_index[0]
    dst = edge_index[1]
    loop = jnp.arange(num_nodes, dtype=edge_index.dtype)
    src = jnp.concatenate([src, loop])
    dst = jnp.concatenate([dst, loop])
    adj = (
        jnp.zeros((padded_nodes, padded_nodes), jnp.bfloat16)
        .at[dst, src]
        .add(jnp.ones(src.shape, jnp.bfloat16))
    )
    deg = jnp.zeros((padded_nodes,), jnp.float32).at[dst].add(1.0)
    dinv = jnp.where(deg > 0, jax.lax.rsqrt(jnp.maximum(deg, 1.0)), 0.0)
    return adj, dinv.reshape(padded_nodes, 1)


# ----------------------------------------------------------------------------
# Kernel 1: feature transform  Z = D^{-1/2} * (X @ W)   (row-tiled)
# ----------------------------------------------------------------------------
def _xw_kernel(x_ref, w_ref, dinv_ref, o_ref):
    xw = jnp.dot(x_ref[...], w_ref[...], preferred_element_type=jnp.float32)
    o_ref[...] = (dinv_ref[...] * xw).astype(o_ref.dtype)


def feature_transform(x, w, dinv, *, tile_m, vmem_limit):
    # TODO(synk): add a k-axis over f_in (with f32 acc) for very wide inputs.
    n_pad, f_in = x.shape
    f_out = w.shape[1]
    ce = pl.CostEstimate(
        flops=2 * n_pad * f_in * f_out,
        transcendentals=0,
        bytes_accessed=(x.size * 2 + w.size * 2 + dinv.size * 4
                        + n_pad * f_out * 2),
    )
    return pl.pallas_call(
        _xw_kernel,
        out_shape=jax.ShapeDtypeStruct((n_pad, f_out), jnp.bfloat16),
        grid=(n_pad // tile_m,),
        in_specs=[
            pl.BlockSpec((tile_m, f_in), lambda i: (i, 0)),
            pl.BlockSpec((f_in, f_out), lambda i: (0, 0)),
            pl.BlockSpec((tile_m, 1), lambda i: (i, 0)),
        ],
        out_specs=pl.BlockSpec((tile_m, f_out), lambda i: (i, 0)),
        compiler_params=pltpu.CompilerParams(
            dimension_semantics=("parallel",),
            vmem_limit_bytes=vmem_limit,
        ),
        cost_estimate=ce,
    )(x, w, dinv)


# ----------------------------------------------------------------------------
# Kernel 2: tiled aggregation  Y = D^{-1/2} * ((A+I) @ Z) + b   (optional ReLU)
# ----------------------------------------------------------------------------
def _agg_kernel(a_ref, xw_ref, dinv_ref, b_ref, o_ref, acc_ref, *,
                apply_relu, xw_resident, tile_k):
    k = pl.program_id(1)

    @pl.when(k == 0)
    def _():
        acc_ref[...] = jnp.zeros_like(acc_ref)

    if xw_resident:
        start = pl.multiple_of(k * tile_k, tile_k)
        xw = xw_ref[pl.ds(start, tile_k), :]
    else:
        xw = xw_ref[...]
    acc_ref[...] += jnp.dot(a_ref[...], xw, preferred_element_type=jnp.float32)

    @pl.when(k == pl.num_programs(1) - 1)
    def _():
        y = dinv_ref[...] * acc_ref[...] + b_ref[...]
        if apply_relu:
            y = jnp.maximum(y, 0.0)
        o_ref[...] = y.astype(o_ref.dtype)


def _agg_vmem_bytes(tile_m, tile_k, n_pad, f_out, xw_resident, out_itemsize):
    a = 2 * tile_m * tile_k * 2                                   # A dbl-buf
    xw = (2 * n_pad * f_out * 2) if xw_resident else (2 * tile_k * f_out * 2)
    acc = tile_m * f_out * 4
    out = 2 * tile_m * f_out * out_itemsize
    misc = 2 * (tile_m * 4 + f_out * 4) + (1 << 20)
    return a + xw + acc + out + misc


def aggregate(a, xw, dinv, b, *, tile_m, tile_k, apply_relu, out_dtype,
              vmem_limit):
    n_pad = a.shape[0]
    f_out = xw.shape[1]
    out_itemsize = jnp.dtype(out_dtype).itemsize
    budget = int(vmem_limit * 0.9)

    xw_resident = (n_pad * f_out * 2) <= _XW_RESIDENT_BYTES
    if xw_resident and _agg_vmem_bytes(
            tile_m, tile_k, n_pad, f_out, True, out_itemsize) > budget:
        xw_resident = False
    while (_agg_vmem_bytes(tile_m, tile_k, n_pad, f_out, xw_resident,
                           out_itemsize) > budget and tile_m > 128):
        tile_m //= 2

    num_row_tiles = n_pad // tile_m
    ce = pl.CostEstimate(
        flops=2 * n_pad * n_pad * f_out,
        transcendentals=0,
        bytes_accessed=(
            n_pad * n_pad * 2
            + xw.size * 2 * (1 if xw_resident else num_row_tiles)
            + dinv.size * 4 + b.size * 4
            + n_pad * f_out * out_itemsize
        ),
    )

    if xw_resident:
        xw_spec = pl.BlockSpec((n_pad, f_out), lambda i, k: (0, 0))
    else:
        xw_spec = pl.BlockSpec((tile_k, f_out), lambda i, k: (k, 0))

    kernel = functools.partial(
        _agg_kernel, apply_relu=apply_relu, xw_resident=xw_resident,
        tile_k=tile_k)

    return pl.pallas_call(
        kernel,
        out_shape=jax.ShapeDtypeStruct((n_pad, f_out), out_dtype),
        grid_spec=pltpu.PrefetchScalarGridSpec(
            num_scalar_prefetch=0,
            grid=(n_pad // tile_m, n_pad // tile_k),
            in_specs=[
                pl.BlockSpec((tile_m, tile_k), lambda i, k: (i, k)),  # A tile
                xw_spec,                                              # Z
                pl.BlockSpec((tile_m, 1), lambda i, k: (i, 0)),       # D^-1/2
                pl.BlockSpec((1, f_out), lambda i, k: (0, 0)),        # bias
            ],
            out_specs=pl.BlockSpec((tile_m, f_out), lambda i, k: (i, 0)),
            scratch_shapes=[pltpu.VMEM((tile_m, f_out), jnp.float32)],
        ),
        compiler_params=pltpu.CompilerParams(
            dimension_semantics=("parallel", "arbitrary"),
            vmem_limit_bytes=vmem_limit,
        ),
        cost_estimate=ce,
    )(a, xw, dinv, b)


# ----------------------------------------------------------------------------
# Full model: GCN(in, hidden, out).forward(x, edge_index)
# ----------------------------------------------------------------------------
def gcn_forward(x, edge_index, params):
    n, f_in = x.shape
    hid = params["w1"].shape[1]
    f_out = params["w2"].shape[1]

    n_pad, tile_m, tile_k = _choose_tiles(n)
    fin_p = _round_up(f_in, _LANE)
    hid_p = _round_up(hid, _LANE)
    out_p = _round_up(f_out, _LANE)
    vmem_limit = _vmem_limit_bytes()

    adj, dinv = build_graph(edge_index, n, n_pad)   # bf16 (A+I), f32 D^-1/2
    x_bf = _pad2(x, n_pad, fin_p, jnp.bfloat16)
    w1_bf = _pad2(params["w1"], fin_p, hid_p, jnp.bfloat16)
    w2_bf = _pad2(params["w2"], hid_p, out_p, jnp.bfloat16)
    b1 = _pad2(params["b1"], 1, hid_p, jnp.float32)
    b2 = _pad2(params["b2"], 1, out_p, jnp.float32)

    # Layer 1: H = relu(D^-1/2 (A+I) D^-1/2 (X W1) + b1)
    z1 = feature_transform(x_bf, w1_bf, dinv, tile_m=tile_m,
                           vmem_limit=vmem_limit)
    h = aggregate(adj, z1, dinv, b1, tile_m=tile_m, tile_k=tile_k,
                  apply_relu=True, out_dtype=jnp.bfloat16,
                  vmem_limit=vmem_limit)
    # Layer 2: OUT = D^-1/2 (A+I) D^-1/2 (H W2) + b2
    z2 = feature_transform(h, w2_bf, dinv, tile_m=tile_m,
                           vmem_limit=vmem_limit)
    out = aggregate(adj, z2, dinv, b2, tile_m=tile_m, tile_k=tile_k,
                    apply_relu=False, out_dtype=jnp.float32,
                    vmem_limit=vmem_limit)
    return out[:n, :f_out]


def init_params(key, in_channels, hidden_channels, out_channels):
    k1, k2 = jax.random.split(key)
    w1 = jax.random.normal(k1, (in_channels, hidden_channels), jnp.float32) * (
        1.0 / jnp.sqrt(in_channels)
    )
    w2 = jax.random.normal(k2, (hidden_channels, out_channels), jnp.float32) * (
        1.0 / jnp.sqrt(hidden_channels)
    )
    b1 = jnp.zeros((1, hidden_channels), jnp.float32)
    b2 = jnp.zeros((1, out_channels), jnp.float32)
    return {"w1": w1, "b1": b1, "w2": w2, "b2": b2}


if __name__ == "__main__":
    key = jax.random.PRNGKey(0)
    kx, kp = jax.random.split(key)

    num_nodes = 8
    in_channels = 4
    hidden_channels = 32
    out_channels = 8

    # Node features (N, F_in)
    x = jax.random.normal(kx, (num_nodes, in_channels), jnp.float32)

    # Ring graph, both directions -> edge_index shape (2, 16)
    src = jnp.arange(num_nodes, dtype=jnp.int32)
    dst = (src + 1) % num_nodes
    edge_index = jnp.stack(
        [jnp.concatenate([src, dst]), jnp.concatenate([dst, src])], axis=0
    )

    params = init_params(kp, in_channels, hidden_channels, out_channels)

    out = gcn_forward(x, edge_index, params)
    out = jax.block_until_ready(out)

    # Pure-JAX reference mirroring the kernel's bf16 quantization (A, X, W,
    # and bf16 intermediates) with f32 accumulation, so the check is tight.
    hi = jax.lax.Precision.HIGHEST
    bf = lambda t: t.astype(jnp.bfloat16).astype(jnp.float32)
    adj_r, dinv_r = build_graph(edge_index, num_nodes, num_nodes)
    adj_f = adj_r.astype(jnp.float32)
    z1_r = bf(dinv_r * jnp.dot(bf(x), bf(params["w1"]), precision=hi))
    h_r = jnp.maximum(
        dinv_r * jnp.dot(adj_f, z1_r, precision=hi) + params["b1"], 0.0)
    z2_r = bf(dinv_r * jnp.dot(bf(h_r), bf(params["w2"]), precision=hi))
    ref = dinv_r * jnp.dot(adj_f, z2_r, precision=hi) + params["b2"]

    assert out.shape == (num_nodes, out_channels)
    assert jnp.allclose(out, ref, atol=1e-2, rtol=1e-2), (
        float(jnp.max(jnp.abs(out - ref)))
    )

    print("KERNEL_OK")
</pallas_src>

<mosaic_0001>
module attributes {stable_mosaic.version = 11 : i64} {
  func.func @_xw_kernel(%arg0: i32, %arg1: memref<64x128xbf16, #tpu.memory_space<vmem>>, %arg2: memref<128x128xbf16, #tpu.memory_space<vmem>>, %arg3: memref<64x1xf32, #tpu.memory_space<vmem>>, %arg4: memref<64x128xbf16, #tpu.memory_space<vmem>>) attributes {dimension_semantics = [#tpu.dimension_semantics<parallel>], iteration_bounds = array<i64: 2>, scalar_prefetch = 0 : i64, scratch_operands = 0 : i64, tpu.core_type = #tpu.core_type<tc>, window_params = [{transform_indices = @transform_0, window_bounds = array<i64: 64, 128>}, {pipeline_mode = #tpu.pipeline_mode<synchronous>, transform_indices = @transform_1, window_bounds = array<i64: 128, 128>}, {transform_indices = @transform_2, window_bounds = array<i64: 64, 1>}, {transform_indices = @transform_3, window_bounds = array<i64: 64, 128>}]} {
    %c0 = arith.constant 0 : index
    %c0_0 = arith.constant 0 : index
    %0 = vector.load %arg1[%c0, %c0_0] : memref<64x128xbf16, #tpu.memory_space<vmem>>, vector<64x128xbf16>
    %c0_1 = arith.constant 0 : index
    %c0_2 = arith.constant 0 : index
    %1 = vector.load %arg2[%c0_1, %c0_2] : memref<128x128xbf16, #tpu.memory_space<vmem>>, vector<128x128xbf16>
    %cst = arith.constant dense<0.000000e+00> : vector<64x128xf32>
    %2 = tpu.matmul %0, %1, %cst {dimension_numbers = #tpu.dot_dimension_numbers<[1], [0], [0], [1], [0, 0, 1, 1], [], []>} : vector<64x128xbf16>, vector<128x128xbf16>, vector<64x128xf32> -> vector<64x128xf32>
    %c0_3 = arith.constant 0 : index
    %c0_4 = arith.constant 0 : index
    %3 = vector.load %arg3[%c0_3, %c0_4] : memref<64x1xf32, #tpu.memory_space<vmem>>, vector<64x1xf32>
    %4 = vector.broadcast %3 : vector<64x1xf32> to vector<64x128xf32>
    %5 = arith.mulf %4, %2 : vector<64x128xf32>
    %6 = arith.truncf %5 : vector<64x128xf32> to vector<64x128xbf16>
    %c0_5 = arith.constant 0 : index
    %c0_6 = arith.constant 0 : index
    %7 = vector.load %arg4[%c0_5, %c0_6] : memref<64x128xbf16, #tpu.memory_space<vmem>>, vector<64x128xbf16>
    tpu.vector_store %arg4[%c0_5, %c0_6], %6 {strides = array<i32>} : memref<64x128xbf16, #tpu.memory_space<vmem>>, vector<64x128xbf16>,
    return
  }
  func.func @transform_0(%arg0: i32) -> (i32, i32) {
    %c0_i32 = arith.constant 0 : i32
    %c0_i32_0 = arith.constant 0 : i32
    return %arg0, %c0_i32 : i32, i32
  }
  func.func @transform_1(%arg0: i32) -> (i32, i32) {
    %c0_i32 = arith.constant 0 : i32
    %c0_i32_0 = arith.constant 0 : i32
    %c0_i32_1 = arith.constant 0 : i32
    return %c0_i32, %c0_i32_0 : i32, i32
  }
  func.func @transform_2(%arg0: i32) -> (i32, i32) {
    %c0_i32 = arith.constant 0 : i32
    %c0_i32_0 = arith.constant 0 : i32
    return %arg0, %c0_i32 : i32, i32
  }
  func.func @transform_3(%arg0: i32) -> (i32, i32) {
    %c0_i32 = arith.constant 0 : i32
    %c0_i32_0 = arith.constant 0 : i32
    return %arg0, %c0_i32 : i32, i32
  }
}

</mosaic_0001>

<llo_original>
// kernel: tpu_custom_call.1
$region0: #{tpu_custom_call.1}
  #allocation0 [shape = 'u32[]', space=smem, size = 0x4, offset = 0x4, fixed_abs, tag = 'smem constant byte address 0x4 - core index']
  #allocation1 [shape = 'u32[144,128]{1,0:T(1,128)}', space=vmem, size = 0x12000, scoped, tag = 'internal scratch']
  %s0 = inlined_call_operand.vmem [shape: bf16[128,128], index: 0, kind: input, shape index: {}]
  %s1 = inlined_call_operand.vmem [shape: bf16[128,128], index: 1, kind: input, shape index: {}]
  %s2 = inlined_call_operand.vmem [shape: f32[128,1], index: 2, kind: input, shape index: {}]
  %s3 = inlined_call_operand.hbm [shape: bf16[128,128], index: 3, kind: output, shape index: {}]
  %s4 = sld [smem:[#allocation0]]
  $region45: #{tpu_custom_call.1} parent=0
    _
  %s6 = ssub.s32 1, %s4
  %s7 = scalar_select 0, %s6, %s4
  $region1: #{tpu_custom_call.1} parent=0
    #allocation2 [shape = 'u8[32768]{0}', space=vmem, size = 0x8000, scoped, tag = 'output window, operand 0']
    #allocation3 [shape = 's32[2]{0}', space=sflag, size = 0x8, scoped, tag = 'scoped memory for tpu_custom_call.1']
    %8 = vsyncpa [#allocation3], 0
    %s9 = scalar_lea.sflag [#allocation3], 1
    %10 = vsyncpa %s9, 0
    loop: start=0, step=1, limit=4
    $region2: #{tpu_custom_call.1} parent=1 // loop_pre_header
      _
    $region3: #{tpu_custom_call.1} parent=1 // loop_header
      %s12 = sphi 0, %s16
      %p13 = scmp.ge.s32.totalorder %s12, 4
      %s22 = sphi 0, %s24
      %s25 = sphi 0, %s22
      %s26 = sphi 0, %s25
      %s42 = sphi 0, %s26
      %s46 = sphi 0, %s46
      %s48 = sphi 0, %s46
      %s49 = sphi 0, %s48
      %s63 = sphi 0, %s49
      %s69 = sphi 0, %s71
      %s72 = sphi 0, %s69
      %s73 = sphi 0, %s72
      %s89 = sphi 0, %s73
      %s95 = sphi 0, %s97
      %s98 = sphi 0, %s95
      %s99 = sphi 0, %s98
      %s115 = sphi 0, %s99
    $region4: #{tpu_custom_call.1} parent=1 // loop_header_branch
      %15 = sbr.rel (%p13) target = $region8
    $region5: #{tpu_custom_call.1} parent=1 // loop_body
      %s17 = ssub.s32 %s12, 1
      %s18 = ssub.s32 %s12, 2
      %s19 = sadd.s32 %s12, 1
      %s20 = ssub.s32 %s12, %s19
      %p21 = scmp.eq.s32.totalorder %s20, 0
      %s23 = sadd.s32 %s22, 1
      %s24 = scalar_select %p21, %s22, %s23
      %p27 = pneg %p21
      %p28 = scmp.eq.s32.totalorder %s12, 1
      %p29 = por %p27, %p28
      %p30 = scmp.ne.s32.totalorder %s22, %s25
      %p31 = scmp.eq.s32.totalorder %s12, 0
      %p32 = por %p30, %p31
      %p33 = scmp.ne.s32.totalorder %s22, %s25
      %p34 = scmp.eq.s32.totalorder %s17, 1
      %p35 = por %p33, %p34
      %p36 = scmp.ne.s32.totalorder %s25, %s26
      %p37 = scmp.eq.s32.totalorder %s17, 0
      %p38 = por %p36, %p37
      %p39 = scmp.ne.s32.totalorder %s25, %s26
      %p40 = scmp.eq.s32.totalorder %s18, 1
      %p41 = por %p39, %p40
      %p43 = scmp.ne.s32.totalorder %s26, %s42
      %p44 = scmp.eq.s32.totalorder %s18, 0
      %p45 = por %p43, %p44
      %s47 = sadd.s32 %s46, 1
      %p50 = scmp.eq.s32.totalorder %s12, 1
      %p51 = scmp.ne.s32.totalorder %s46, %s48
      %p52 = scmp.eq.s32.totalorder %s12, 0
      %p53 = por %p51, %p52
      %p54 = scmp.ne.s32.totalorder %s46, %s48
      %p55 = scmp.eq.s32.totalorder %s17, 1
      %p56 = por %p54, %p55
      %p57 = scmp.ne.s32.totalorder %s48, %s49
      %p58 = scmp.eq.s32.totalorder %s17, 0
      %p59 = por %p57, %p58
      %p60 = scmp.ne.s32.totalorder %s48, %s49
      %p61 = scmp.eq.s32.totalorder %s18, 1
      %p62 = por %p60, %p61
      %p64 = scmp.ne.s32.totalorder %s49, %s63
      %p65 = scmp.eq.s32.totalorder %s18, 0
      %p66 = por %p64, %p65
      %s67 = ssub.s32 %s12, %s19
      %p68 = scmp.eq.s32.totalorder %s67, 0
      %s70 = sadd.s32 %s69, 1
      %s71 = scalar_select %p68, %s69, %s70
      %p74 = pneg %p68
      %p75 = scmp.eq.s32.totalorder %s12, 1
      %p76 = por %p74, %p75
      %p77 = scmp.ne.s32.totalorder %s69, %s72
      %p78 = scmp.eq.s32.totalorder %s12, 0
      %p79 = por %p77, %p78
      %p80 = scmp.ne.s32.totalorder %s69, %s72
      %p81 = scmp.eq.s32.totalorder %s17, 1
      %p82 = por %p80, %p81
      %p83 = scmp.ne.s32.totalorder %s72, %s73
      %p84 = scmp.eq.s32.totalorder %s17, 0
      %p85 = por %p83, %p84
      %p86 = scmp.ne.s32.totalorder %s72, %s73
      %p87 = scmp.eq.s32.totalorder %s18, 1
      %p88 = por %p86, %p87
      %p90 = scmp.ne.s32.totalorder %s73, %s89
      %p91 = scmp.eq.s32.totalorder %s18, 0
      %p92 = por %p90, %p91
      %s93 = ssub.s32 %s12, %s19
      %p94 = scmp.eq.s32.totalorder %s93, 0
      %s96 = sadd.s32 %s95, 1
      %s97 = scalar_select %p94, %s95, %s96
      %p100 = pneg %p94
      %p101 = scmp.eq.s32.totalorder %s12, 1
      %p102 = por %p100, %p101
      %p103 = scmp.ne.s32.totalorder %s95, %s98
      %p104 = scmp.eq.s32.totalorder %s12, 0
      %p105 = por %p103, %p104
      %p106 = scmp.ne.s32.totalorder %s95, %s98
      %p107 = scmp.eq.s32.totalorder %s17, 1
      %p108 = por %p106, %p107
      %p109 = scmp.ne.s32.totalorder %s98, %s99
      %p110 = scmp.eq.s32.totalorder %s17, 0
      %p111 = por %p109, %p110
      %p112 = scmp.ne.s32.totalorder %s98, %s99
      %p113 = scmp.eq.s32.totalorder %s18, 1
      %p114 = por %p112, %p113
      %p116 = scmp.ne.s32.totalorder %s99, %s115
      %p117 = scmp.eq.s32.totalorder %s18, 0
      %p118 = por %p116, %p117
      %p119 = scmp.le.s32.totalorder 1, %s12
      %p120 = scmp.lt.s32.totalorder %s12, 3
      %p121 = pnand %p119, %p120
      %p122 = pneg %p121
      // Predicated region
      $region9: #{tpu_custom_call.1} parent=5 // pred_check
        _
      $region10: #{tpu_custom_call.1} parent=5 // pred_check_branch
        %124 = sbr.rel (%p121) target = $region12
      $region11: #{tpu_custom_call.1} parent=5 // pred_region
        %s125 = ssub.s32 %s12, 1
        // Predicated region
        $region13: #{tpu_custom_call.1} parent=11 // pred_check
          %p126 = pneg %p59
        $region14: #{tpu_custom_call.1} parent=11 // pred_check_branch
          %128 = sbr.rel (%p126) target = $region16
        $region15: #{tpu_custom_call.1} parent=11 // pred_region
          _
        $region16: #{tpu_custom_call.1} parent=11 // pred_fallthru
          _
      $region12: #{tpu_custom_call.1} parent=5 // pred_fallthru
        _
      %p129 = scmp.lt.s32.totalorder %s12, 2
      // Predicated region
      $region17: #{tpu_custom_call.1} parent=5 // pred_check
        %p130 = pneg %p129
      $region18: #{tpu_custom_call.1} parent=5 // pred_check_branch
        %132 = sbr.rel (%p130) target = $region20
      $region19: #{tpu_custom_call.1} parent=5 // pred_region
        // Predicated region
        $region21: #{tpu_custom_call.1} parent=19 // pred_check
          %p133 = pneg %p32
        $region22: #{tpu_custom_call.1} parent=19 // pred_check_branch
          %135 = sbr.rel (%p133) target = $region24
        $region23: #{tpu_custom_call.1} parent=19 // pred_region
          %s136 = smul.u32 8, %s12
          %p137 = scmp.lt.s32.totalorder %s136, 15
          %s138 = scalar_select %p137, %s136, 15
          %s139 = smul.addr %s138, 4
          %s140 = scalar_lea.vmem %s0, %s139
          %s141 = smul.u32 8, %s12
        $region24: #{tpu_custom_call.1} parent=19 // pred_fallthru
          _
        // Predicated region
        $region25: #{tpu_custom_call.1} parent=19 // pred_check
          %p142 = pneg %p79
        $region26: #{tpu_custom_call.1} parent=19 // pred_check_branch
          %144 = sbr.rel (%p142) target = $region28
        $region27: #{tpu_custom_call.1} parent=19 // pred_region
          %s145 = smul.u32 8, %s12
          %p146 = scmp.lt.s32.totalorder %s145, 15
          %s147 = scalar_select %p146, %s145, 15
          %s148 = smul.addr %s147, 8
          %s149 = scalar_lea.vmem %s2, %s148
          %s150 = smul.u32 8, %s12
        $region28: #{tpu_custom_call.1} parent=19 // pred_fallthru
          _
      $region20: #{tpu_custom_call.1} parent=5 // pred_fallthru
        _
      %p151 = scmp.le.s32.totalorder 1, %s12
      %p152 = scmp.lt.s32.totalorder %s12, 3
      %p153 = pnand %p151, %p152
      %p154 = pneg %p153
      // Predicated region
      $region29: #{tpu_custom_call.1} parent=5 // pred_check
        _
      $region30: #{tpu_custom_call.1} parent=5 // pred_check_branch
        %156 = sbr.rel (%p153) target = $region32
      $region31: #{tpu_custom_call.1} parent=5 // pred_region
        %s157 = ssub.s32 %s12, 1
        %s158 = smul.u32 8, %s17
        %p159 = scmp.lt.s32.totalorder %s158, 15
        %s160 = scalar_select %p159, %s158, 15
        %s161 = smul.addr %s160, 4
        %s162 = scalar_lea.vmem %s0, %s161
        %p163 = pneg %p38
        %p164 = pneg %p35
        %p165 = pneg %p59
        %p166 = pneg %p56
        %s167 = smul.u32 8, %s17
        %p168 = scmp.lt.s32.totalorder %s167, 15
        %s169 = scalar_select %p168, %s167, 15
        %s170 = smul.addr %s169, 8
        %s171 = scalar_lea.vmem %s2, %s170
        %p172 = pneg %p85
        %p173 = pneg %p82
        %p174 = pneg %p111
        %p175 = pneg %p108
        %s176 = sand.u32 %s98, 1
        %s177 = scalar_lea.sflag [#allocation3], %s176
        %s178 = sand.u32 %s98, 1
        %s179 = smul.addr %s178, 32
        %s180 = scalar_lea.vmem [#allocation2], %s179
        %s181 = smul.u32 8, %s17
        %p182 = scmp.lt.s32.totalorder %s181, 15
        %s183 = scalar_select %p182, %s181, 15
        %s184 = smul.addr %s183, 4
        %s185 = scalar_lea.vmem %s0, %s184
        %s186 = smul.u32 8, %s17
        %s187 = smul.u32 8, %s17
        %p188 = scmp.lt.s32.totalorder %s187, 15
        %s189 = scalar_select %p188, %s187, 15
        %s190 = smul.addr %s189, 8
        %s191 = scalar_lea.vmem %s2, %s190
        %s192 = smul.u32 8, %s17
        %s193 = smul.u32 8, %s17
        %v195 = vld [vmem:[%s185] sm:$0xf]
        %v196 = vld [vmem:[%s185 + $0x4] sm:$0xf]
        %v197 = vld [vmem:[%s185 + $0x8] sm:$0xf]
        %v198 = vld [vmem:[%s185 + $0xc] sm:$0xf]
        %v199 = vld [vmem:[%s185 + $0x10] sm:$0xf]
        %v200 = vld [vmem:[%s185 + $0x14] sm:$0xf]
        %v201 = vld [vmem:[%s185 + $0x18] sm:$0xf]
        %v202 = vld [vmem:[%s185 + $0x1c] sm:$0xf]
        %v203 = vld [vmem:[%s1] sm:$0xf]
        %v204 = vld [vmem:[%s1 + $0x4] sm:$0xf]
        %v205 = vld [vmem:[%s1 + $0x8] sm:$0xf]
        %v206 = vld [vmem:[%s1 + $0xc] sm:$0xf]
        %v207 = vld [vmem:[%s1 + $0x10] sm:$0xf]
        %v208 = vld [vmem:[%s1 + $0x14] sm:$0xf]
        %v209 = vld [vmem:[%s1 + $0x18] sm:$0xf]
        %v210 = vld [vmem:[%s1 + $0x1c] sm:$0xf]
        %v211 = vld [vmem:[%s1 + $0x20] sm:$0xf]
        %v212 = vld [vmem:[%s1 + $0x24] sm:$0xf]
        %v213 = vld [vmem:[%s1 + $0x28] sm:$0xf]
        %v214 = vld [vmem:[%s1 + $0x2c] sm:$0xf]
        %v215 = vld [vmem:[%s1 + $0x30] sm:$0xf]
        %v216 = vld [vmem:[%s1 + $0x34] sm:$0xf]
        %v217 = vld [vmem:[%s1 + $0x38] sm:$0xf]
        %v218 = vld [vmem:[%s1 + $0x3c] sm:$0xf]
        %v227 = vunpack.c.l.b16 %v195
        %v228 = vunpack.c.l.b16 %v196
        %v229 = vunpack.c.l.b16 %v197
        %v230 = vunpack.c.l.b16 %v198
        %v231 = vunpack.c.l.b16 %v199
        %v232 = vunpack.c.l.b16 %v200
        %v233 = vunpack.c.l.b16 %v201
        %v234 = vunpack.c.l.b16 %v202
        %v235 = vpack.c.b16 %v228, %v227
        %v236 = vpack.c.b16 %v230, %v229
        %v237 = vpack.c.b16 %v232, %v231
        %v238 = vpack.c.b16 %v234, %v233
        %v259 = vunpack.c.l.b16 %v203
        %v260 = vunpack.c.l.b16 %v204
        %v261 = vunpack.c.l.b16 %v205
        %v262 = vunpack.c.l.b16 %v206
        %v263 = vunpack.c.l.b16 %v207
        %v264 = vunpack.c.l.b16 %v208
        %v265 = vunpack.c.l.b16 %v209
        %v266 = vunpack.c.l.b16 %v210
        %v267 = vunpack.c.l.b16 %v211
        %v268 = vunpack.c.l.b16 %v212
        %v269 = vunpack.c.l.b16 %v213
        %v270 = vunpack.c.l.b16 %v214
        %v271 = vunpack.c.l.b16 %v215
        %v272 = vunpack.c.l.b16 %v216
        %v273 = vunpack.c.l.b16 %v217
        %v274 = vunpack.c.l.b16 %v218
        %v275 = vpack.c.b16 %v260, %v259
        %v276 = vpack.c.b16 %v262, %v261
        %v277 = vpack.c.b16 %v264, %v263
        %v278 = vpack.c.b16 %v266, %v265
        %v279 = vpack.c.b16 %v268, %v267
        %v280 = vpack.c.b16 %v270, %v269
        %v281 = vpack.c.b16 %v272, %v271
        %v282 = vpack.c.b16 %v274, %v273
        %291 = vmatprep.subr.bf16.mxu0 0
        %292 = vmatpush1.bf16.msra.mxu0 %v282
        %293 = vmatprep.subr.bf16.mxu0 0
        %294 = vmatpush1.bf16.msra.mxu0 %v281
        %295 = vmatprep.subr.bf16.mxu0 0
        %296 = vmatpush1.bf16.msra.mxu0 %v280
        %297 = vmatprep.subr.bf16.mxu0 0
        %298 = vmatpush1.bf16.msra.mxu0 %v279
        %299 = vmatprep.subr.bf16.mxu0 0
        %300 = vmatpush1.bf16.msra.mxu0 %v278
        %301 = vmatprep.subr.bf16.mxu0 0
        %302 = vmatpush1.bf16.msra.mxu0 %v277
        %303 = vmatprep.subr.bf16.mxu0 0
        %304 = vmatpush1.bf16.msra.mxu0 %v276
        %305 = vmatprep.subr.bf16.mxu0 0
        %306 = vmatpush1.bf16.msra.mxu0 %v275
        %307 = vmatprep.subr.bf16.mxu0 0
        %308 = vmatpush2.bf16.msra.mxu0 0
        %309 = vmatprep.subr.bf16.mxu0 0
        %310 = vmatpush2.bf16.msra.mxu0 0
        %311 = vmatprep.subr.bf16.mxu0 0
        %312 = vmatpush2.bf16.msra.mxu0 0
        %313 = vmatprep.subr.bf16.mxu0 0
        %314 = vmatpush2.bf16.msra.mxu0 0
        %315 = vmatprep.subr.bf16.mxu0 0
        %316 = vmatpush2.bf16.msra.mxu0 0
        %317 = vmatprep.subr.bf16.mxu0 0
        %318 = vmatpush2.bf16.msra.mxu0 0
        %319 = vmatprep.subr.bf16.mxu0 0
        %320 = vmatpush2.bf16.msra.mxu0 0
        %321 = vmatprep.subr.bf16.mxu0 0
        %322 = vmatpush2.bf16.msra.mxu0 0
        %323 = vmatprep.mubr.bf16.mxu0 0
        %324 = vmatmul.mubr.bf16.gmra.mxu0 %v235
        %v325 = vpop.f32.mrf.mxu0
        %v326 = vadd.f32 0.0, %v325
        %v327 = vpop.f32.mrf.mxu0
        %v328 = vpop.f32.mrf.mxu0
        %v329 = vadd.f32 0.0, %v328
        %v330 = vpop.f32.mrf.mxu0
        %331 = vmatprep.mubr.bf16.mxu0 0
        %332 = vmatmul.mubr.bf16.gmra.mxu0 %v236
        %v333 = vpop.f32.mrf.mxu0
        %v334 = vadd.f32 0.0, %v333
        %v335 = vpop.f32.mrf.mxu0
        %v336 = vpop.f32.mrf.mxu0
        %v337 = vadd.f32 0.0, %v336
        %v338 = vpop.f32.mrf.mxu0
        %339 = vmatprep.mubr.bf16.mxu0 0
        %340 = vmatmul.mubr.bf16.gmra.mxu0 %v237
        %v341 = vpop.f32.mrf.mxu0
        %v342 = vadd.f32 0.0, %v341
        %v343 = vpop.f32.mrf.mxu0
        %v344 = vpop.f32.mrf.mxu0
        %v345 = vadd.f32 0.0, %v344
        %v346 = vpop.f32.mrf.mxu0
        %347 = vmatprep.mubr.bf16.mxu0 0
        %348 = vmatmul.mubr.bf16.gmra.mxu0 %v238
        %v349 = vpop.f32.mrf.mxu0
        %v350 = vadd.f32 0.0, %v349
        %v351 = vpop.f32.mrf.mxu0
        %v352 = vpop.f32.mrf.mxu0
        %v353 = vadd.f32 0.0, %v352
        %v354 = vpop.f32.mrf.mxu0
        %355 = vdwg.mxu0
        %v356 = vld [vmem:[%s191] sm:$0xff]
        %v357 = vld [vmem:[%s191 + $0x8] sm:$0xff]
        %v358 = vld [vmem:[%s191 + $0x10] sm:$0xff]
        %v359 = vld [vmem:[%s191 + $0x18] sm:$0xff]
        %v360 = vld [vmem:[%s191 + $0x20] sm:$0xff]
        %v361 = vld [vmem:[%s191 + $0x28] sm:$0xff]
        %v362 = vld [vmem:[%s191 + $0x30] sm:$0xff]
        %v363 = vld [vmem:[%s191 + $0x38] sm:$0xff]
        %365 = vset.pattern.permute.xlu0 0
        %366 = vperm.xlu0 %365, %v356
        %v367 = vpop.permute.xlu0 %366
        %370 = vset.pattern.permute.xlu0 0
        %371 = vperm.xlu0 %370, %v357
        %v372 = vpop.permute.xlu0 %371
        %375 = vset.pattern.permute.xlu0 0
        %376 = vperm.xlu0 %375, %v358
        %v377 = vpop.permute.xlu0 %376
        %380 = vset.pattern.permute.xlu0 0
        %381 = vperm.xlu0 %380, %v359
        %v382 = vpop.permute.xlu0 %381
        %385 = vset.pattern.permute.xlu0 0
        %386 = vperm.xlu0 %385, %v360
        %v387 = vpop.permute.xlu0 %386
        %390 = vset.pattern.permute.xlu0 0
        %391 = vperm.xlu0 %390, %v361
        %v392 = vpop.permute.xlu0 %391
        %395 = vset.pattern.permute.xlu0 0
        %396 = vperm.xlu0 %395, %v362
        %v397 = vpop.permute.xlu0 %396
        %400 = vset.pattern.permute.xlu0 0
        %401 = vperm.xlu0 %400, %v363
        %v402 = vpop.permute.xlu0 %401
        %v404 = vmul.f32 %v367, %v326
        %v405 = vmul.f32 %v372, %v329
        %v406 = vmul.f32 %v377, %v334
        %v407 = vmul.f32 %v382, %v337
        %v408 = vmul.f32 %v387, %v342
        %v409 = vmul.f32 %v392, %v345
        %v410 = vmul.f32 %v397, %v350
        %v411 = vmul.f32 %v402, %v353
        %v412 = vpack.c.bf16 %v405, %v404
        %v413 = vpack.c.bf16 %v407, %v406
        %v414 = vpack.c.bf16 %v409, %v408
        %v415 = vpack.c.bf16 %v411, %v410
        %v420 = vunpack.c.l.b16 %v412
        %v421 = vunpack.c.h.b16 %v412
        %v422 = vunpack.c.l.b16 %v413
        %v423 = vunpack.c.h.b16 %v413
        %v424 = vunpack.c.l.b16 %v414
        %v425 = vunpack.c.h.b16 %v414
        %v426 = vunpack.c.l.b16 %v415
        %v427 = vunpack.c.h.b16 %v415
        %v428 = vpack.c.b16 %v420, %v420
        %v429 = vpack.c.b16 %v421, %v421
        %v430 = vpack.c.b16 %v422, %v422
        %v431 = vpack.c.b16 %v423, %v423
        %v432 = vpack.c.b16 %v424, %v424
        %v433 = vpack.c.b16 %v425, %v425
        %v434 = vpack.c.b16 %v426, %v426
        %v435 = vpack.c.b16 %v427, %v427
        %444 = vst [vmem:[%s180] sm:$0xf] %v428
        %445 = vst [vmem:[%s180 + $0x4] sm:$0xf] %v429
        %446 = vst [vmem:[%s180 + $0x8] sm:$0xf] %v430
        %447 = vst [vmem:[%s180 + $0xc] sm:$0xf] %v431
        %448 = vst [vmem:[%s180 + $0x10] sm:$0xf] %v432
        %449 = vst [vmem:[%s180 + $0x14] sm:$0xf] %v433
        %450 = vst [vmem:[%s180 + $0x18] sm:$0xf] %v434
        %451 = vst [vmem:[%s180 + $0x1c] sm:$0xf] %v435
        %s452 = sand.u32 %s98, 1
        %s453 = scalar_lea.sflag [#allocation3], %s452
        %s454 = sand.u32 %s98, 1
        %s455 = smul.addr %s454, 32
        %s456 = scalar_lea.vmem [#allocation2], %s455
        // Predicated region
        $region33: #{tpu_custom_call.1} parent=31 // pred_check
          %p457 = pneg %p108
        $region34: #{tpu_custom_call.1} parent=31 // pred_check_branch
          %459 = sbr.rel (%p457) target = $region36
        $region35: #{tpu_custom_call.1} parent=31 // pred_region
          %s460 = smul.u32 8, %s17
          %s462 = ssub.s32 512, 512
          %463 = vsyncadd %s453, %s462
          %s464 = smul.addr %s460, 64
          %s465 = scalar_lea.hbm %s3, %s464
          %s466 = sshll.u32 %s456, 4
          %s467 = int_to_ptr.vmem [resolvable:$true] %s466
          %472 = dma.vmem_to_hbm [thread:$0]  %s467, 512, %s465, %s453, 64, 64, 4
        $region36: #{tpu_custom_call.1} parent=31 // pred_fallthru
          _
      $region32: #{tpu_custom_call.1} parent=5 // pred_fallthru
        _
      %p473 = scmp.le.s32.totalorder 2, %s12
      // Predicated region
      $region37: #{tpu_custom_call.1} parent=5 // pred_check
        %p474 = pneg %p473
      $region38: #{tpu_custom_call.1} parent=5 // pred_check_branch
        %476 = sbr.rel (%p474) target = $region40
      $region39: #{tpu_custom_call.1} parent=5 // pred_region
        %s477 = ssub.s32 %s12, 2
        // Predicated region
        $region41: #{tpu_custom_call.1} parent=39 // pred_check
          %p478 = pneg %p114
        $region42: #{tpu_custom_call.1} parent=39 // pred_check_branch
          %480 = sbr.rel (%p478) target = $region44
        $region43: #{tpu_custom_call.1} parent=39 // pred_region
          %s481 = sand.u32 %s99, 1
          %s482 = scalar_lea.sflag [#allocation3], %s481
          %s483 = sand.u32 %s99, 1
          %s484 = smul.addr %s483, 32
          %s485 = scalar_lea.vmem [#allocation2], %s484
          %486 = dma.done %s482, 512
        $region44: #{tpu_custom_call.1} parent=39 // pred_fallthru
          _
      $region40: #{tpu_custom_call.1} parent=5 // pred_fallthru
        _
    $region6: #{tpu_custom_call.1} parent=1 // loop_footer
      %s16 = sadd.s32 1, %s12
    $region7: #{tpu_custom_call.1} parent=1 // loop_footer_branch
      %11 = sbr.rel target = $region3
    $region8: #{tpu_custom_call.1} parent=1 // loop_exit
      _
    %487 = vsyncpa [#allocation3], 1
    %s488 = scalar_lea.sflag [#allocation3], 1
    %489 = vsyncpa %s488, 1

</llo_original>
